<compile_context>
chip_gen: v5e
topology: v5e:2x2
jax: 0.10.0
libtpu: 0.0.40
codegen_flags: <defaults>
</compile_context>

<pallas_src>
import functools

import jax
import jax.numpy as jnp
from jax.experimental import pallas as pl
from jax.experimental.pallas import tpu as pltpu

_GAMMA = 2.0          # statically 2.0 -> diff * diff in the kernel
_ALPHA = 0.25
_POS_THRESH = 0.004
_EPS = 1e-14
_LANES = 128
_BLOCK_ROWS = 512     # sublane rows per grid step (256 KiB / input tile, f32)


def _hmap_loss_kernel(pred_ref, target_ref, out_ref,
                      pos_sum_acc, pos_cnt_acc, neg_sum_acc):
    """Streams (tm, 128) tiles, accumulating elementwise partial sums in VMEM.

    pred_ref, target_ref : VMEM (tm, 128) tiles of the flattened inputs
    out_ref              : SMEM (3,) f32 -> [pos_sum, pos_cnt(+pad), neg_sum]
    *_acc                : VMEM (tm, 128) f32 vector accumulators
    """
    i = pl.program_id(0)

    @pl.when(i == 0)
    def _():
        pos_sum_acc[...] = jnp.zeros_like(pos_sum_acc)
        pos_cnt_acc[...] = jnp.zeros_like(pos_cnt_acc)
        neg_sum_acc[...] = jnp.zeros_like(neg_sum_acc)

    # Upcast in-register (handles bf16 inputs without a wrapper-side copy).
    p = pred_ref[...].astype(jnp.float32)
    t = target_ref[...].astype(jnp.float32)

    sig = jax.nn.sigmoid(p)
    diff = jnp.abs(t - sig)
    # gamma == 2.0 statically: diff**2 == diff*diff (no pow -> no extra EUP).
    base = -(diff * diff) * jnp.log(1.0 - diff + _EPS)

    is_pos = t >= _POS_THRESH  # padding (t == 0.5) lands here with base == 0

    pos_sum_acc[...] += jnp.where(is_pos, base * t, 0.0)
    pos_cnt_acc[...] += is_pos.astype(jnp.float32)
    neg_sum_acc[...] += jnp.where(is_pos, 0.0, base)

    @pl.when(i == pl.num_programs(0) - 1)
    def _():
        out_ref[0] = jnp.sum(pos_sum_acc[...])
        out_ref[1] = jnp.sum(pos_cnt_acc[...])
        out_ref[2] = jnp.sum(neg_sum_acc[...])


@functools.partial(jax.jit, static_argnames=("block_rows",))
def hmap_loss(pred, target, *, block_rows=_BLOCK_ROWS):
    """Pallas implementation of HMapLoss.forward(pred, target).

    Returns (loss, mean(pos_loss), mean(neg_loss)) as float32 scalars.
    """
    assert pred.shape == target.shape
    n = pred.size  # static at trace time

    pred_f = jnp.ravel(pred)
    target_f = jnp.ravel(target)

    rows = pl.cdiv(n, _LANES)
    if rows <= block_rows:
        # Single grid step covering the whole (small) array.
        tm = max(8, ((rows + 7) // 8) * 8)
    else:
        tm = block_rows
    rows_padded = pl.cdiv(rows, tm) * tm
    n_padded = rows_padded * _LANES
    pad = n_padded - n  # static Python int

    if pad:
        # Pad pred with 0 and target with sigmoid(0) = 0.5:
        #   diff == 0 exactly -> base == 0 -> zero contribution to the sums.
        # Padded elements are classified as positives, so subtracting `pad`
        # from pos_cnt below is an exact correction.
        pred_f = jnp.pad(pred_f, (0, pad))
        target_f = jnp.pad(target_f, (0, pad), constant_values=0.5)

    pred2 = pred_f.reshape(rows_padded, _LANES)
    target2 = target_f.reshape(rows_padded, _LANES)

    grid = (rows_padded // tm,)

    sums = pl.pallas_call(
        _hmap_loss_kernel,
        out_shape=jax.ShapeDtypeStruct((3,), jnp.float32),
        grid_spec=pltpu.PrefetchScalarGridSpec(
            num_scalar_prefetch=0,
            grid=grid,
            in_specs=[
                pl.BlockSpec((tm, _LANES), lambda i: (i, 0)),
                pl.BlockSpec((tm, _LANES), lambda i: (i, 0)),
            ],
            out_specs=pl.BlockSpec(memory_space=pltpu.SMEM),
            scratch_shapes=[
                pltpu.VMEM((tm, _LANES), jnp.float32),
                pltpu.VMEM((tm, _LANES), jnp.float32),
                pltpu.VMEM((tm, _LANES), jnp.float32),
            ],
        ),
        compiler_params=pltpu.CompilerParams(
            dimension_semantics=("arbitrary",),
        ),
    )(pred2, target2)

    pos_sum = sums[0]
    pos_cnt = sums[1] - jnp.float32(pad)   # exact: padding counted as positives
    neg_sum = sums[2]
    neg_cnt = jnp.float32(n) - pos_cnt

    # torch.mean of an empty tensor is NaN; 0/0 here reproduces that.
    pos_mean = pos_sum / pos_cnt
    neg_mean = neg_sum / neg_cnt
    pos_ratio = pos_cnt / jnp.float32(n)
    alpha = jnp.maximum(jnp.float32(_ALPHA), pos_ratio)
    loss = alpha * pos_mean + (1.0 - alpha) * neg_mean
    return loss, pos_mean, neg_mean


def _reference(pred, target):
    """Pure-JAX reference matching the PyTorch semantics."""
    pred = pred.astype(jnp.float32).ravel()
    target = target.astype(jnp.float32).ravel()
    diff = jnp.abs(target - jax.nn.sigmoid(pred))
    base = -(diff ** _GAMMA) * jnp.log(1.0 - diff + _EPS)
    pos = target >= _POS_THRESH
    pos_cnt = jnp.sum(pos)
    neg_cnt = jnp.sum(~pos)
    pos_mean = jnp.sum(jnp.where(pos, base * target, 0.0)) / pos_cnt
    neg_mean = jnp.sum(jnp.where(pos, 0.0, base)) / neg_cnt
    pos_ratio = pos_cnt / (pos_cnt + neg_cnt)
    alpha = jnp.maximum(jnp.float32(_ALPHA), pos_ratio)
    loss = alpha * pos_mean + (1.0 - alpha) * neg_mean
    return loss, pos_mean, neg_mean


if __name__ == "__main__":
    key = jax.random.PRNGKey(0)
    k1, k2, _ = jax.random.split(key, 3)

    # NCHW heatmap-style inputs: batch=2, channels=4, spatial=16x16
    pred = jax.random.normal(k1, (2, 4, 16, 16), dtype=jnp.float32)
    u = jax.random.uniform(k2, (2, 4, 16, 16), dtype=jnp.float32)
    # sparse heatmap target: mostly zeros (negatives), some peaks (positives)
    target = jnp.where(u > 0.9, u, 0.0)

    loss, pos_mean, neg_mean = hmap_loss(pred, target)
    jax.block_until_ready((loss, pos_mean, neg_mean))

    ref_loss, ref_pos, ref_neg = _reference(pred, target)
    assert jnp.allclose(loss, ref_loss, rtol=1e-5, atol=1e-6)
    assert jnp.allclose(pos_mean, ref_pos, rtol=1e-5, atol=1e-6)
    assert jnp.allclose(neg_mean, ref_neg, rtol=1e-5, atol=1e-6)

    print("KERNEL_OK")
</pallas_src>

<mosaic_0001>
module attributes {stable_mosaic.version = 11 : i64} {
  func.func @_hmap_loss_kernel(%arg0: i32, %arg1: memref<16x128xf32, #tpu.memory_space<vmem>>, %arg2: memref<16x128xf32, #tpu.memory_space<vmem>>, %arg3: memref<3xf32, #tpu.memory_space<smem>>, %arg4: memref<16x128xf32, #tpu.memory_space<vmem>>, %arg5: memref<16x128xf32, #tpu.memory_space<vmem>>, %arg6: memref<16x128xf32, #tpu.memory_space<vmem>>) attributes {dimension_semantics = [#tpu.dimension_semantics<arbitrary>], iteration_bounds = array<i64: 1>, scalar_prefetch = 0 : i64, scratch_operands = 3 : i64, tpu.core_type = #tpu.core_type<tc>, window_params = [{transform_indices = @transform_0, window_bounds = array<i64: 16, 128>}, {transform_indices = @transform_1, window_bounds = array<i64: 16, 128>}, {transform_indices = @transform_2, window_bounds = array<i64: 3>}]} {
    %c0_i32 = arith.constant 0 : i32
    %0 = arith.cmpi eq, %arg0, %c0_i32 : i32
    %1 = arith.extui %0 : i1 to i32
    %c0_i32_0 = arith.constant 0 : i32
    %2 = arith.cmpi ne, %1, %c0_i32_0 : i32
    scf.if %2 {
      %cst_24 = arith.constant 0.000000e+00 : f32
      %42 = vector.broadcast %cst_24 : f32 to vector<16x128xf32>
      %c0_25 = arith.constant 0 : index
      %c0_26 = arith.constant 0 : index
      %43 = vector.load %arg4[%c0_25, %c0_26] : memref<16x128xf32, #tpu.memory_space<vmem>>, vector<16x128xf32>
      tpu.vector_store %arg4[%c0_25, %c0_26], %42 {strides = array<i32>} : memref<16x128xf32, #tpu.memory_space<vmem>>, vector<16x128xf32>,
      %cst_27 = arith.constant 0.000000e+00 : f32
      %44 = vector.broadcast %cst_27 : f32 to vector<16x128xf32>
      %c0_28 = arith.constant 0 : index
      %c0_29 = arith.constant 0 : index
      %45 = vector.load %arg5[%c0_28, %c0_29] : memref<16x128xf32, #tpu.memory_space<vmem>>, vector<16x128xf32>
      tpu.vector_store %arg5[%c0_28, %c0_29], %44 {strides = array<i32>} : memref<16x128xf32, #tpu.memory_space<vmem>>, vector<16x128xf32>,
      %cst_30 = arith.constant 0.000000e+00 : f32
      %46 = vector.broadcast %cst_30 : f32 to vector<16x128xf32>
      %c0_31 = arith.constant 0 : index
      %c0_32 = arith.constant 0 : index
      %47 = vector.load %arg6[%c0_31, %c0_32] : memref<16x128xf32, #tpu.memory_space<vmem>>, vector<16x128xf32>
      tpu.vector_store %arg6[%c0_31, %c0_32], %46 {strides = array<i32>} : memref<16x128xf32, #tpu.memory_space<vmem>>, vector<16x128xf32>,
    } else {
    }
    %c0 = arith.constant 0 : index
    %c0_1 = arith.constant 0 : index
    %3 = vector.load %arg1[%c0, %c0_1] : memref<16x128xf32, #tpu.memory_space<vmem>>, vector<16x128xf32>
    %c0_2 = arith.constant 0 : index
    %c0_3 = arith.constant 0 : index
    %4 = vector.load %arg2[%c0_2, %c0_3] : memref<16x128xf32, #tpu.memory_space<vmem>>, vector<16x128xf32>
    %5 = arith.negf %3 : vector<16x128xf32>
    %6 = math.exp %5 : vector<16x128xf32>
    %cst = arith.constant 1.000000e+00 : f32
    %7 = vector.broadcast %cst : f32 to vector<16x128xf32>
    %8 = arith.addf %7, %6 : vector<16x128xf32>
    %9 = arith.divf %7, %8 : vector<16x128xf32>
    %10 = arith.subf %4, %9 : vector<16x128xf32>
    %11 = math.absf %10 : vector<16x128xf32>
    %12 = arith.mulf %11, %11 : vector<16x128xf32>
    %cst_4 = arith.constant 0.000000e+00 : f32
    %13 = vector.broadcast %cst_4 : f32 to vector<16x128xf32>
    %14 = arith.subf %13, %12 : vector<16x128xf32>
    %cst_5 = arith.constant 1.000000e+00 : f32
    %15 = vector.broadcast %cst_5 : f32 to vector<16x128xf32>
    %16 = arith.subf %15, %11 : vector<16x128xf32>
    %cst_6 = arith.constant 9.99999982E-15 : f32
    %17 = vector.broadcast %cst_6 : f32 to vector<16x128xf32>
    %18 = arith.addf %16, %17 : vector<16x128xf32>
    %19 = math.log %18 : vector<16x128xf32>
    %20 = arith.mulf %14, %19 : vector<16x128xf32>
    %cst_7 = arith.constant 4.000000e-03 : f32
    %21 = vector.broadcast %cst_7 : f32 to vector<16x128xf32>
    %22 = arith.cmpf oge, %4, %21 : vector<16x128xf32>
    %c0_8 = arith.constant 0 : index
    %c0_9 = arith.constant 0 : index
    %23 = vector.load %arg4[%c0_8, %c0_9] : memref<16x128xf32, #tpu.memory_space<vmem>>, vector<16x128xf32>
    %24 = arith.mulf %20, %4 : vector<16x128xf32>
    %cst_10 = arith.constant 0.000000e+00 : f32
    %25 = vector.broadcast %cst_10 : f32 to vector<16x128xf32>
    %26 = arith.select %22, %24, %25 : vector<16x128xi1>, vector<16x128xf32>
    %27 = arith.addf %23, %26 : vector<16x128xf32>
    %c0_11 = arith.constant 0 : index
    %c0_12 = arith.constant 0 : index
    %28 = vector.load %arg4[%c0_11, %c0_12] : memref<16x128xf32, #tpu.memory_space<vmem>>, vector<16x128xf32>
    tpu.vector_store %arg4[%c0_11, %c0_12], %27 {strides = array<i32>} : memref<16x128xf32, #tpu.memory_space<vmem>>, vector<16x128xf32>,
    %c0_13 = arith.constant 0 : index
    %c0_14 = arith.constant 0 : index
    %29 = vector.load %arg5[%c0_13, %c0_14] : memref<16x128xf32, #tpu.memory_space<vmem>>, vector<16x128xf32>
    %30 = arith.extui %22 : vector<16x128xi1> to vector<16x128xi32>
    %31 = arith.sitofp %30 : vector<16x128xi32> to vector<16x128xf32>
    %32 = arith.addf %29, %31 : vector<16x128xf32>
    %c0_15 = arith.constant 0 : index
    %c0_16 = arith.constant 0 : index
    %33 = vector.load %arg5[%c0_15, %c0_16] : memref<16x128xf32, #tpu.memory_space<vmem>>, vector<16x128xf32>
    tpu.vector_store %arg5[%c0_15, %c0_16], %32 {strides = array<i32>} : memref<16x128xf32, #tpu.memory_space<vmem>>, vector<16x128xf32>,
    %c0_17 = arith.constant 0 : index
    %c0_18 = arith.constant 0 : index
    %34 = vector.load %arg6[%c0_17, %c0_18] : memref<16x128xf32, #tpu.memory_space<vmem>>, vector<16x128xf32>
    %cst_19 = arith.constant 0.000000e+00 : f32
    %35 = vector.broadcast %cst_19 : f32 to vector<16x128xf32>
    %36 = arith.select %22, %35, %20 : vector<16x128xi1>, vector<16x128xf32>
    %37 = arith.addf %34, %36 : vector<16x128xf32>
    %c0_20 = arith.constant 0 : index
    %c0_21 = arith.constant 0 : index
    %38 = vector.load %arg6[%c0_20, %c0_21] : memref<16x128xf32, #tpu.memory_space<vmem>>, vector<16x128xf32>
    tpu.vector_store %arg6[%c0_20, %c0_21], %37 {strides = array<i32>} : memref<16x128xf32, #tpu.memory_space<vmem>>, vector<16x128xf32>,
    %c0_i32_22 = arith.constant 0 : i32
    %39 = arith.cmpi eq, %arg0, %c0_i32_22 : i32
    %40 = arith.extui %39 : i1 to i32
    %c0_i32_23 = arith.constant 0 : i32
    %41 = arith.cmpi ne, %40, %c0_i32_23 : i32
    scf.if %41 {
      %c0_24 = arith.constant 0 : index
      %c0_25 = arith.constant 0 : index
      %42 = vector.load %arg4[%c0_24, %c0_25] : memref<16x128xf32, #tpu.memory_space<vmem>>, vector<16x128xf32>
      %43 = vector.shape_cast %42 : vector<16x128xf32> to vector<1x16x128xf32>
      %cst_26 = arith.constant dense<0.000000e+00> : vector<1xf32>
      %44 = vector.multi_reduction <add>, %43, %cst_26 [1, 2] : vector<1x16x128xf32> to vector<1xf32>
      %45 = vector.shape_cast %44 : vector<1xf32> to vector<1x1x1xf32>
      %46 = vector.extract %45[0, 0, 0] : f32 from vector<1x1x1xf32>
      %c0_27 = arith.constant 0 : index
      %47 = memref.load %arg3[%c0_27] : memref<3xf32, #tpu.memory_space<smem>>
      memref.store %46, %arg3[%c0_27] : memref<3xf32, #tpu.memory_space<smem>>
      %c0_28 = arith.constant 0 : index
      %c0_29 = arith.constant 0 : index
      %48 = vector.load %arg5[%c0_28, %c0_29] : memref<16x128xf32, #tpu.memory_space<vmem>>, vector<16x128xf32>
      %49 = vector.shape_cast %48 : vector<16x128xf32> to vector<1x16x128xf32>
      %cst_30 = arith.constant dense<0.000000e+00> : vector<1xf32>
      %50 = vector.multi_reduction <add>, %49, %cst_30 [1, 2] : vector<1x16x128xf32> to vector<1xf32>
      %51 = vector.shape_cast %50 : vector<1xf32> to vector<1x1x1xf32>
      %52 = vector.extract %51[0, 0, 0] : f32 from vector<1x1x1xf32>
      %c1 = arith.constant 1 : index
      %53 = memref.load %arg3[%c1] : memref<3xf32, #tpu.memory_space<smem>>
      memref.store %52, %arg3[%c1] : memref<3xf32, #tpu.memory_space<smem>>
      %c0_31 = arith.constant 0 : index
      %c0_32 = arith.constant 0 : index
      %54 = vector.load %arg6[%c0_31, %c0_32] : memref<16x128xf32, #tpu.memory_space<vmem>>, vector<16x128xf32>
      %55 = vector.shape_cast %54 : vector<16x128xf32> to vector<1x16x128xf32>
      %cst_33 = arith.constant dense<0.000000e+00> : vector<1xf32>
      %56 = vector.multi_reduction <add>, %55, %cst_33 [1, 2] : vector<1x16x128xf32> to vector<1xf32>
      %57 = vector.shape_cast %56 : vector<1xf32> to vector<1x1x1xf32>
      %58 = vector.extract %57[0, 0, 0] : f32 from vector<1x1x1xf32>
      %c2 = arith.constant 2 : index
      %59 = memref.load %arg3[%c2] : memref<3xf32, #tpu.memory_space<smem>>
      memref.store %58, %arg3[%c2] : memref<3xf32, #tpu.memory_space<smem>>
    } else {
    }
    return
  }
  func.func @transform_0(%arg0: i32) -> (i32, i32) {
    %c0_i32 = arith.constant 0 : i32
    %c0_i32_0 = arith.constant 0 : i32
    return %arg0, %c0_i32 : i32, i32
  }
  func.func @transform_1(%arg0: i32) -> (i32, i32) {
    %c0_i32 = arith.constant 0 : i32
    %c0_i32_0 = arith.constant 0 : i32
    return %arg0, %c0_i32 : i32, i32
  }
  func.func @transform_2(%arg0: i32) -> i32 {
    %c0_i32 = arith.constant 0 : i32
    %c0_i32_0 = arith.constant 0 : i32
    return %c0_i32 : i32
  }
}

</mosaic_0001>

<llo_original>
// kernel: hmap_loss.1
$region0: #{hmap_loss.1}
  #allocation0 [shape = 'u32[]', space=smem, size = 0x4, offset = 0x4, fixed_abs, tag = 'smem constant byte address 0x4 - core index']
  #allocation1 [shape = 'u32[72,128]{1,0:T(1,128)}', space=vmem, size = 0x9000, scoped, tag = 'internal scratch']
  #allocation2 [shape = 'f32[16,128]{1,0:T(8,128)}', space=vmem, size = 0x2000, scoped, tag = 'scratch operand']
  #allocation3 [shape = 'f32[16,128]{1,0:T(8,128)}', space=vmem, size = 0x2000, scoped, tag = 'scratch operand']
  #allocation4 [shape = 'f32[16,128]{1,0:T(8,128)}', space=vmem, size = 0x2000, scoped, tag = 'scratch operand']
  %s0 = inlined_call_operand.vmem [shape: f32[16,128], index: 0, kind: input, shape index: {}]
  %s1 = inlined_call_operand.vmem [shape: f32[16,128], index: 1, kind: input, shape index: {}]
  %s2 = inlined_call_operand.vmem [shape: f32[3], index: 2, kind: output, shape index: {}]
  %s3 = sld [smem:[#allocation0]]
  $region26: #{hmap_loss.1} parent=0
    _
  %s5 = ssub.s32 1, %s3
  %s6 = scalar_select 0, %s5, %s3
  $region1: #{hmap_loss.1} parent=0
    #allocation5 [shape = 'u8[512]{0}', space=smem, size = 0x200, scoped, tag = 'output window, operand 0, single buffered']
    #allocation6 [shape = 's32[1]{0}', space=sflag, size = 0x4, scoped, tag = 'scoped memory for hmap_loss.1']
    %7 = vsyncpa [#allocation6], 0
    // Predicated region
    $region2: #{hmap_loss.1} parent=1 // pred_check
      _
    $region3: #{hmap_loss.1} parent=1 // pred_check_branch
      %9 = sbr.rel (0) target = $region5
    $region4: #{hmap_loss.1} parent=1 // pred_region
      _
    $region5: #{hmap_loss.1} parent=1 // pred_fallthru
      _
    // Predicated region
    $region6: #{hmap_loss.1} parent=1 // pred_check
      _
    $region7: #{hmap_loss.1} parent=1 // pred_check_branch
      %11 = sbr.rel (0) target = $region9
    $region8: #{hmap_loss.1} parent=1 // pred_region
      _
    $region9: #{hmap_loss.1} parent=1 // pred_fallthru
      _
    %p12 = scmp.eq.s32.totalorder 0, 0
    // Predicated region
    $region10: #{hmap_loss.1} parent=1 // pred_check
      %p13 = pneg %p12
    $region11: #{hmap_loss.1} parent=1 // pred_check_branch
      %15 = sbr.rel (%p13) target = $region13
    $region12: #{hmap_loss.1} parent=1 // pred_region
      %16 = vst [vmem:[#allocation2] sm:$0xff] 0.0
      %17 = vst [vmem:[#allocation2 + $0x8] sm:$0xff] 0.0
      %18 = vst [vmem:[#allocation3] sm:$0xff] 0.0
      %19 = vst [vmem:[#allocation3 + $0x8] sm:$0xff] 0.0
      %20 = vst [vmem:[#allocation4] sm:$0xff] 0.0
      %21 = vst [vmem:[#allocation4 + $0x8] sm:$0xff] 0.0
    $region13: #{hmap_loss.1} parent=1 // pred_fallthru
      _
    %v22 = vld [vmem:[%s0] sm:$0xff]
    %v23 = vld [vmem:[%s0 + $0x8] sm:$0xff]
    %v24 = vld [vmem:[%s1] sm:$0xff]
    %v25 = vld [vmem:[%s1 + $0x8] sm:$0xff]
    %v26 = vxor.u32 %v22, 2147483648
    %v27 = vxor.u32 %v23, 2147483648
    %v28 = vmul.f32 %v26, 1.442695
    %v29 = vpow.pop %v28
    %v30 = vmul.f32 %v27, 1.442695
    %v31 = vpow.pop %v30
    %v32 = vadd.f32 %v29, 1.0
    %v33 = vadd.f32 %v31, 1.0
    %v34 = vrcp.pop %v32
    %v35 = vmul.f32 %v32, %v34
    %v36 = vsub.f32 1.0, %v35
    %v37 = vmul.f32 %v34, %v36
    %v38 = vadd.f32 %v34, %v37
    %vm39 = vweird.f32 %v32
    %vm40 = vweird.f32 %v34
    %vm41 = vmor %vm39, %vm40
    %v42 = vsel %vm41, %v34, %v38
    %v43 = vand.u32 2147483647, %v32
    %vm44 = vcmp.eq.f32.partialorder %v43, 8.507059e+37
    %v45 = vand.u32 %v32, 2147483648
    %v46 = vor.u32 1.1754944e-38, %v45
    %v47 = vsel %vm44, %v46, %v42
    %v48 = vmul.f32 1.0, %v47
    %v49 = vrcp.pop %v33
    %v50 = vmul.f32 %v33, %v49
    %v51 = vsub.f32 1.0, %v50
    %v52 = vmul.f32 %v49, %v51
    %v53 = vadd.f32 %v49, %v52
    %vm54 = vweird.f32 %v33
    %vm55 = vweird.f32 %v49
    %vm56 = vmor %vm54, %vm55
    %v57 = vsel %vm56, %v49, %v53
    %v58 = vand.u32 2147483647, %v33
    %vm59 = vcmp.eq.f32.partialorder %v58, 8.507059e+37
    %v60 = vand.u32 %v33, 2147483648
    %v61 = vor.u32 1.1754944e-38, %v60
    %v62 = vsel %vm59, %v61, %v57
    %v63 = vmul.f32 1.0, %v62
    %v64 = vsub.f32 %v24, %v48
    %v65 = vsub.f32 %v25, %v63
    %v66 = vand.u32 2147483647, %v64
    %v67 = vand.u32 2147483647, %v65
    %v68 = vmul.f32 %v66, %v66
    %v69 = vmul.f32 %v67, %v67
    %v70 = vsub.f32 0.0, %v68
    %v71 = vsub.f32 0.0, %v69
    %v72 = vsub.f32 1.0, %v66
    %v73 = vsub.f32 1.0, %v67
    %v74 = vadd.f32 %v72, 1e-14
    %v75 = vadd.f32 %v73, 1e-14
    %v76 = vlog2.pop %v74
    %v77 = vmul.f32 %v76, 0.6931472
    %v78 = vlog2.pop %v75
    %v79 = vmul.f32 %v78, 0.6931472
    %v80 = vmul.f32 %v70, %v77
    %v81 = vmul.f32 %v71, %v79
    %vm82 = vcmp.ge.f32.partialorder %v24, 0.004
    %vm83 = vcmp.ge.f32.partialorder %v25, 0.004
    %v84 = vld [vmem:[#allocation2] sm:$0xff]
    %v85 = vld [vmem:[#allocation2 + $0x8] sm:$0xff]
    %v86 = vmul.f32 %v80, %v24
    %v87 = vmul.f32 %v81, %v25
    %v88 = vsel %vm82, %v86, 0.0
    %v89 = vsel %vm83, %v87, 0.0
    %v90 = vadd.f32 %v84, %v88
    %v91 = vadd.f32 %v85, %v89
    %92 = vst [vmem:[#allocation2] sm:$0xff] %v90
    %93 = vst [vmem:[#allocation2 + $0x8] sm:$0xff] %v91
    %v94 = vld [vmem:[#allocation3] sm:$0xff]
    %v95 = vld [vmem:[#allocation3 + $0x8] sm:$0xff]
    %v96 = vsel %vm82, 1, 0
    %v97 = vsel %vm83, 1, 0
    %v98 = vcvt.s32.f32 %v96
    %v99 = vcvt.s32.f32 %v97
    %v100 = vadd.f32 %v94, %v98
    %v101 = vadd.f32 %v95, %v99
    %102 = vst [vmem:[#allocation3] sm:$0xff] %v100
    %103 = vst [vmem:[#allocation3 + $0x8] sm:$0xff] %v101
    %v104 = vld [vmem:[#allocation4] sm:$0xff]
    %v105 = vld [vmem:[#allocation4 + $0x8] sm:$0xff]
    %v106 = vsel %vm82, 0.0, %v80
    %v107 = vsel %vm83, 0.0, %v81
    %v108 = vadd.f32 %v104, %v106
    %v109 = vadd.f32 %v105, %v107
    %110 = vst [vmem:[#allocation4] sm:$0xff] %v108
    %111 = vst [vmem:[#allocation4 + $0x8] sm:$0xff] %v109
    // Predicated region
    $region14: #{hmap_loss.1} parent=1 // pred_check
      %p112 = pneg %p12
    $region15: #{hmap_loss.1} parent=1 // pred_check_branch
      %114 = sbr.rel (%p112) target = $region17
    $region16: #{hmap_loss.1} parent=1 // pred_region
      %v115 = vld [vmem:[#allocation2] sm:$0xff]
      %v116 = vld [vmem:[#allocation2 + $0x8] sm:$0xff]
      %v117 = vadd.f32 %v115, %v116
      %118 = vadd.xlane.f32.xlu0 %v117
      %v119 = vpop.xlane.xlu0 %118
      %v120 = vrot.slane %v119, 4
      %v121 = vadd.f32 %v119, %v120
      %v122 = vrot.slane %v121, 2
      %v123 = vadd.f32 %v121, %v122
      %v124 = vrot.slane %v123, 1
      %v125 = vadd.f32 %v123, %v124
      %s126 = vtos %v125
      %s127 = scalar_lea.smem [#allocation5], 0
      %128 = sst [smem:[%s127]] %s126
      %v129 = vld [vmem:[#allocation3] sm:$0xff]
      %v130 = vld [vmem:[#allocation3 + $0x8] sm:$0xff]
      %v131 = vadd.f32 %v129, %v130
      %132 = vadd.xlane.f32.xlu0 %v131
      %v133 = vpop.xlane.xlu0 %132
      %v134 = vrot.slane %v133, 4
      %v135 = vadd.f32 %v133, %v134
      %v136 = vrot.slane %v135, 2
      %v137 = vadd.f32 %v135, %v136
      %v138 = vrot.slane %v137, 1
      %v139 = vadd.f32 %v137, %v138
      %s140 = vtos %v139
      %s141 = scalar_lea.smem [#allocation5], 1
      %142 = sst [smem:[%s141]] %s140
      %v143 = vld [vmem:[#allocation4] sm:$0xff]
      %v144 = vld [vmem:[#allocation4 + $0x8] sm:$0xff]
      %v145 = vadd.f32 %v143, %v144
      %146 = vadd.xlane.f32.xlu0 %v145
      %v147 = vpop.xlane.xlu0 %146
      %v148 = vrot.slane %v147, 4
      %v149 = vadd.f32 %v147, %v148
      %v150 = vrot.slane %v149, 2
      %v151 = vadd.f32 %v149, %v150
      %v152 = vrot.slane %v151, 1
      %v153 = vadd.f32 %v151, %v152
      %s154 = vtos %v153
      %s155 = scalar_lea.smem [#allocation5], 2
      %156 = sst [smem:[%s155]] %s154
    $region17: #{hmap_loss.1} parent=1 // pred_fallthru
      _
    // Predicated region
    $region18: #{hmap_loss.1} parent=1 // pred_check
      _
    $region19: #{hmap_loss.1} parent=1 // pred_check_branch
      %158 = sbr.rel (0) target = $region21
    $region20: #{hmap_loss.1} parent=1 // pred_region
      %160 = vsyncadd [#allocation6], 0
      %s162 = sshll.u32 %s2, 4
      %s163 = int_to_ptr.vmem [resolvable:$true] %s162
      %165 = dma.smem_to_vmem [#allocation5], 16, %s163, [#allocation6]
    $region21: #{hmap_loss.1} parent=1 // pred_fallthru
      _
    // Predicated region
    $region22: #{hmap_loss.1} parent=1 // pred_check
      _
    $region23: #{hmap_loss.1} parent=1 // pred_check_branch
      %167 = sbr.rel (0) target = $region25
    $region24: #{hmap_loss.1} parent=1 // pred_region
      %169 = dma.done [#allocation6], 16
    $region25: #{hmap_loss.1} parent=1 // pred_fallthru
      _
    %170 = sfence
    %171 = vsyncpa [#allocation6], 1

</llo_original>
